<compile_context>
chip_gen: v6e
topology: v6e:2x2x1
jax: 0.10.0
libtpu: 0.0.40
codegen_flags: <defaults>
</compile_context>

<pallas_src>
import jax
import jax.numpy as jnp
from jax.experimental import pallas as pl
from jax.experimental.pallas import tpu as pltpu


def _round_up(a, b):
    return (a + b - 1) // b * b


def _linear_kernel(x_ref, w_ref, b_ref, o_ref):
    # One MXU matmul per (tm, pack*K) tile against the VMEM-resident
    # block-diagonal weight, f32 accumulation, broadcast bias add.
    acc = jnp.dot(x_ref[...], w_ref[...], preferred_element_type=jnp.float32)
    o_ref[...] = (acc + b_ref[...]).astype(o_ref.dtype)


def pack_linear_params(weight, bias, pack):
    """Pre-pack nn.Linear params (PyTorch (out,in) weight, (out,) bias).

    Returns a block-diagonal (pack*in, pack*out) weight and a (1, pack*out)
    bias so `pack` logical rows are processed per lane-dense packed row.
    Called once per weight update (cached), never in the per-call path.
    """
    n_out, _ = weight.shape
    w_t = weight.T                                              # (K, N)
    w_blk = jnp.kron(jnp.eye(pack, dtype=weight.dtype), w_t)    # (pack*K, pack*N)
    b_pack = jnp.tile(bias, pack).reshape(1, pack * n_out)
    return w_blk, b_pack


def _tile_config():
    """Per-generation (tile_rows_packed, vmem_limit_bytes)."""
    try:
        kind = jax.devices()[0].device_kind.lower()
    except Exception:
        kind = ""
    if "v7" in kind:
        # v7x: 64 MiB physical / 32 MiB scoped-default VMEM per TC.
        return 8192, 32 << 20
    if "v6" in kind:
        # v6e: 128 MiB physical; raise scoped limit above default 32 MiB.
        return 16384, 56 << 20
    if "v5" in kind:
        # v5e: scoped default is only 16 MiB; bump explicitly.
        return 8192, 28 << 20
    return 8192, 32 << 20


def make_output_forward(weight, bias, *, pack=None, tile_rows=None,
                        vmem_limit_bytes=None, min_pallas_rows=2048,
                        force_pallas=False):
    """Build a cached, jitted forward: y = x @ weight.T + bias.

    weight: (N, K) in PyTorch nn.Linear layout; bias: (N,). x: (..., K).
    """
    n, k = weight.shape
    assert bias.shape == (n,)

    if pack is None:
        # pack=8 -> 256-lane-dense x blocks; AI ~14 flop/byte keeps v5e/v6e/v7x
        # comfortably memory-bound (do not raise past 8/16 per perf review).
        pack = max(1, min(8, 256 // max(k, n)))

    default_rows, default_vmem = _tile_config()
    if tile_rows is None:
        tile_rows = default_rows
    if vmem_limit_bytes is None:
        vmem_limit_bytes = default_vmem

    # --- hoisted / cached parameter packing (once per weight update) ---
    w_t = weight.T
    w_blk, b_pack = pack_linear_params(weight, bias, pack)
    w_blk = jax.block_until_ready(w_blk)
    b_pack = jax.block_until_ready(b_pack)

    @jax.jit
    def forward(x):
        assert x.shape[-1] == k
        lead = x.shape[:-1]
        m = 1
        for d in lead:
            m *= d

        # Small-M fast path: launch + pipeline prologue dominate for tiny M.
        if not force_pallas and m < min_pallas_rows:
            return (x @ w_t + bias).astype(x.dtype)

        # Sublane granularity: 8 rows for 4-byte dtypes, 16 for 2-byte (bf16).
        itemsize = jnp.dtype(x.dtype).itemsize
        sublane = 8 if itemsize >= 4 else 16

        x2d = x.reshape(m, k)
        # Pad only to a multiple of `pack` (<= pack-1 rows); fused into the
        # pallas_call input via allow_input_fusion (no standalone HBM copy).
        m_pad = _round_up(m, pack)
        if m_pad != m:
            x2d = jnp.pad(x2d, ((0, m_pad - m), (0, 0)))
        m_p = m_pad // pack
        x_packed = x2d.reshape(m_p, pack * k)     # lane-dense (pack*K = 256) rows

        tm = min(_round_up(tile_rows, sublane), _round_up(m_p, sublane))
        grid = (pl.cdiv(m_p, tm),)                # ragged last block is masked

        out_packed = pl.pallas_call(
            _linear_kernel,
            out_shape=jax.ShapeDtypeStruct((m_p, pack * n), x.dtype),
            grid_spec=pltpu.PrefetchScalarGridSpec(
                num_scalar_prefetch=0,
                grid=grid,
                in_specs=[
                    # Streamed input tiles (double-buffered by the pipeline).
                    pl.BlockSpec((tm, pack * k), lambda i: (i, 0)),
                    # Tiny weight/bias: same block every step -> VMEM-resident.
                    pl.BlockSpec((pack * k, pack * n), lambda i: (0, 0)),
                    pl.BlockSpec((1, pack * n), lambda i: (0, 0)),
                ],
                out_specs=pl.BlockSpec((tm, pack * n), lambda i: (i, 0)),
            ),
            compiler_params=pltpu.CompilerParams(
                dimension_semantics=("parallel",),
                vmem_limit_bytes=vmem_limit_bytes,
                allow_input_fusion=[True, True, True],
            ),
        )(x_packed, w_blk, b_pack)

        out2d = out_packed.reshape(m_pad, n)[:m]
        return out2d.reshape(lead + (n,))

    return forward


def output_embedding_forward(x, weight, bias, **kwargs):
    """One-off convenience wrapper (prefer make_output_forward + reuse)."""
    return make_output_forward(weight, bias, **kwargs)(x)


if __name__ == "__main__":
    # Output module config: input_embeding_units=32 (in features),
    # in_channels=4 (out features). x: (batch, seq, input_embeding_units).
    input_embeding_units = 32
    in_channels = 4
    batch, seq = 2, 8

    key = jax.random.PRNGKey(0)
    kx, kw, kb, kx2 = jax.random.split(key, 4)

    x = jax.random.normal(kx, (batch, seq, input_embeding_units), dtype=jnp.float32)

    # Deterministic params (matches nn.Linear's uniform(-1/sqrt(in), 1/sqrt(in)) range).
    bound = 1.0 / jnp.sqrt(jnp.float32(input_embeding_units))
    weight = jax.random.uniform(
        kw, (in_channels, input_embeding_units), dtype=jnp.float32,
        minval=-bound, maxval=bound)
    bias = jax.random.uniform(
        kb, (in_channels,), dtype=jnp.float32,
        minval=-bound, maxval=bound)

    # 1) Pallas path at the small module shape (forced past the small-M fast path).
    fwd_pallas = make_output_forward(weight, bias, force_pallas=True)
    out = fwd_pallas(x)
    jax.block_until_ready(out)
    ref = x @ weight.T + bias
    assert out.shape == (batch, seq, in_channels)
    assert jnp.allclose(out, ref, atol=1e-4, rtol=1e-4), (
        float(jnp.max(jnp.abs(out - ref))))

    # 2) Pallas path with a tiny tile to exercise the pad-to-pack + ragged
    #    (masked) last grid block on an unaligned M.
    x2 = jax.random.normal(kx2, (3, 67, input_embeding_units), dtype=jnp.float32)
    fwd_multi = make_output_forward(weight, bias, force_pallas=True, tile_rows=8)
    out2 = fwd_multi(x2)
    jax.block_until_ready(out2)
    ref2 = x2 @ weight.T + bias
    assert out2.shape == (3, 67, in_channels)
    assert jnp.allclose(out2, ref2, atol=1e-4, rtol=1e-4), (
        float(jnp.max(jnp.abs(out2 - ref2))))

    # 3) Default path: tiny M takes the plain-XLA fast path.
    fwd_auto = make_output_forward(weight, bias)
    out3 = fwd_auto(x)
    jax.block_until_ready(out3)
    assert jnp.allclose(out3, ref, atol=1e-4, rtol=1e-4)

    print("KERNEL_OK")
</pallas_src>

<mosaic_0001>
module attributes {stable_mosaic.version = 11 : i64} {
  func.func @_linear_kernel(%arg0: i32, %arg1: memref<8x256xf32, #tpu.memory_space<vmem>>, %arg2: memref<256x32xf32, #tpu.memory_space<vmem>>, %arg3: memref<1x32xf32, #tpu.memory_space<vmem>>, %arg4: memref<8x32xf32, #tpu.memory_space<vmem>>) attributes {dimension_semantics = [#tpu.dimension_semantics<parallel>], iteration_bounds = array<i64: 1>, scalar_prefetch = 0 : i64, scratch_operands = 0 : i64, tpu.core_type = #tpu.core_type<tc>, window_params = [{transform_indices = @transform_0, window_bounds = array<i64: 8, 256>}, {pipeline_mode = #tpu.pipeline_mode<synchronous>, transform_indices = @transform_1, window_bounds = array<i64: 256, 32>}, {pipeline_mode = #tpu.pipeline_mode<synchronous>, transform_indices = @transform_2, window_bounds = array<i64: 1, 32>}, {transform_indices = @transform_3, window_bounds = array<i64: 8, 32>}]} {
    %c0 = arith.constant 0 : index
    %c0_0 = arith.constant 0 : index
    %0 = vector.load %arg1[%c0, %c0_0] : memref<8x256xf32, #tpu.memory_space<vmem>>, vector<8x256xf32>
    %c0_1 = arith.constant 0 : index
    %c0_2 = arith.constant 0 : index
    %1 = vector.load %arg2[%c0_1, %c0_2] : memref<256x32xf32, #tpu.memory_space<vmem>>, vector<256x32xf32>
    %cst = arith.constant dense<0.000000e+00> : vector<8x32xf32>
    %2 = tpu.matmul %0, %1, %cst {dimension_numbers = #tpu.dot_dimension_numbers<[1], [0], [0], [1], [0, 0, 1, 1], [], []>} : vector<8x256xf32>, vector<256x32xf32>, vector<8x32xf32> -> vector<8x32xf32>
    %c0_3 = arith.constant 0 : index
    %c0_4 = arith.constant 0 : index
    %3 = vector.load %arg3[%c0_3, %c0_4] : memref<1x32xf32, #tpu.memory_space<vmem>>, vector<1x32xf32>
    %4 = vector.broadcast %3 : vector<1x32xf32> to vector<8x32xf32>
    %5 = arith.addf %2, %4 : vector<8x32xf32>
    %c0_5 = arith.constant 0 : index
    %c0_6 = arith.constant 0 : index
    %6 = vector.load %arg4[%c0_5, %c0_6] : memref<8x32xf32, #tpu.memory_space<vmem>>, vector<8x32xf32>
    tpu.vector_store %arg4[%c0_5, %c0_6], %5 {strides = array<i32>} : memref<8x32xf32, #tpu.memory_space<vmem>>, vector<8x32xf32>,
    return
  }
  func.func @transform_0(%arg0: i32) -> (i32, i32) {
    %c0_i32 = arith.constant 0 : i32
    %c0_i32_0 = arith.constant 0 : i32
    return %arg0, %c0_i32 : i32, i32
  }
  func.func @transform_1(%arg0: i32) -> (i32, i32) {
    %c0_i32 = arith.constant 0 : i32
    %c0_i32_0 = arith.constant 0 : i32
    %c0_i32_1 = arith.constant 0 : i32
    return %c0_i32, %c0_i32_0 : i32, i32
  }
  func.func @transform_2(%arg0: i32) -> (i32, i32) {
    %c0_i32 = arith.constant 0 : i32
    %c0_i32_0 = arith.constant 0 : i32
    %c0_i32_1 = arith.constant 0 : i32
    return %c0_i32, %c0_i32_0 : i32, i32
  }
  func.func @transform_3(%arg0: i32) -> (i32, i32) {
    %c0_i32 = arith.constant 0 : i32
    %c0_i32_0 = arith.constant 0 : i32
    return %arg0, %c0_i32 : i32, i32
  }
}

</mosaic_0001>

<llo_original>
// kernel: forward.1
$region0: #{forward.1}
  #allocation0 [shape = 'u32[]', space=smem, size = 0x4, offset = 0x4, fixed_abs, tag = 'smem constant byte address 0x4 - core index']
  #allocation1 [shape = 'u32[144,128]{1,0:T(1,128)}', space=vmem, size = 0x12000, scoped, tag = 'internal scratch']
  %s0 = inlined_call_operand.vmem [shape: f32[2,256], index: 0, kind: input, shape index: {}]
  %s1 = inlined_call_operand.hbm [shape: f32[256,32], index: 1, kind: input, shape index: {}]
  %s2 = inlined_call_operand.vmem [shape: f32[1,32], index: 2, kind: input, shape index: {}]
  %s3 = inlined_call_operand.vmem [shape: f32[2,32], index: 3, kind: output, shape index: {}]
  %s4 = sld [smem:[#allocation0]]
  $region56: #{forward.1} parent=0
    _
  %s6 = ssub.s32 1, %s4
  %s7 = scalar_select 0, %s6, %s4
  $region1: #{forward.1} parent=0
    #allocation2 [shape = 'u8[131072]{0}', space=vmem, size = 0x20000, scoped, tag = 'input window, operand 1, single buffered']
    #allocation3 [shape = 's32[1]{0}', space=sflag, size = 0x4, scoped, tag = 'scoped memory for forward.1']
    #allocation4 [shape = 'u8[4096]{0}', space=vmem, size = 0x1000, scoped, tag = 'output window, operand 0, single buffered']
    %8 = vsyncpa [#allocation3], 0
    // Predicated region
    $region2: #{forward.1} parent=1 // pred_check
      _
    $region3: #{forward.1} parent=1 // pred_check_branch
      %10 = sbr.rel (0) target = $region5
    $region4: #{forward.1} parent=1 // pred_region
      _
    $region5: #{forward.1} parent=1 // pred_fallthru
      _
    // Predicated region
    $region6: #{forward.1} parent=1 // pred_check
      _
    $region7: #{forward.1} parent=1 // pred_check_branch
      %12 = sbr.rel (0) target = $region9
    $region8: #{forward.1} parent=1 // pred_region
      %s14 = ssub.s32 4096, 4096
      %15 = vsyncadd [#allocation3], %s14
      %s16 = sshll.u32 [#allocation2], 4
      %s17 = int_to_ptr.vmem [resolvable:$true] %s16
      %22 = dma.hbm_to_vmem [thread:$0]  %s1, 4096, %s17, [#allocation3], 128, 128, 8
    $region9: #{forward.1} parent=1 // pred_fallthru
      _
    // Predicated region
    $region10: #{forward.1} parent=1 // pred_check
      _
    $region11: #{forward.1} parent=1 // pred_check_branch
      %24 = sbr.rel (0) target = $region13
    $region12: #{forward.1} parent=1 // pred_region
      _
    $region13: #{forward.1} parent=1 // pred_fallthru
      _
    // Predicated region
    $region14: #{forward.1} parent=1 // pred_check
      _
    $region15: #{forward.1} parent=1 // pred_check_branch
      %26 = sbr.rel (0) target = $region17
    $region16: #{forward.1} parent=1 // pred_region
      %27 = dma.done [#allocation3], 4096
    $region17: #{forward.1} parent=1 // pred_fallthru
      _
    %v28 = vld [vmem:[%s0] sm:$0xf]
    %v29 = vld [vmem:[%s0 + $0x4] sm:$0xf]
    %v30 = vld [vmem:[%s0 + $0x8] sm:$0xf]
    %v31 = vld [vmem:[%s0 + $0xc] sm:$0xf]
    %v32 = vld [vmem:[#allocation2] sm:$0xff]
    %v33 = vld [vmem:[#allocation2 + $0x8] sm:$0xff]
    %v34 = vld [vmem:[#allocation2 + $0x10] sm:$0xff]
    %v35 = vld [vmem:[#allocation2 + $0x18] sm:$0xff]
    %v36 = vld [vmem:[#allocation2 + $0x20] sm:$0xff]
    %v37 = vld [vmem:[#allocation2 + $0x28] sm:$0xff]
    %v38 = vld [vmem:[#allocation2 + $0x30] sm:$0xff]
    %v39 = vld [vmem:[#allocation2 + $0x38] sm:$0xff]
    %v40 = vld [vmem:[#allocation2 + $0x40] sm:$0xff]
    %v41 = vld [vmem:[#allocation2 + $0x48] sm:$0xff]
    %v42 = vld [vmem:[#allocation2 + $0x50] sm:$0xff]
    %v43 = vld [vmem:[#allocation2 + $0x58] sm:$0xff]
    %v44 = vld [vmem:[#allocation2 + $0x60] sm:$0xff]
    %v45 = vld [vmem:[#allocation2 + $0x68] sm:$0xff]
    %v46 = vld [vmem:[#allocation2 + $0x70] sm:$0xff]
    %v47 = vld [vmem:[#allocation2 + $0x78] sm:$0xff]
    %v48 = vld [vmem:[#allocation2 + $0x80] sm:$0xff]
    %v49 = vld [vmem:[#allocation2 + $0x88] sm:$0xff]
    %v50 = vld [vmem:[#allocation2 + $0x90] sm:$0xff]
    %v51 = vld [vmem:[#allocation2 + $0x98] sm:$0xff]
    %v52 = vld [vmem:[#allocation2 + $0xa0] sm:$0xff]
    %v53 = vld [vmem:[#allocation2 + $0xa8] sm:$0xff]
    %v54 = vld [vmem:[#allocation2 + $0xb0] sm:$0xff]
    %v55 = vld [vmem:[#allocation2 + $0xb8] sm:$0xff]
    %v56 = vld [vmem:[#allocation2 + $0xc0] sm:$0xff]
    %v57 = vld [vmem:[#allocation2 + $0xc8] sm:$0xff]
    %v58 = vld [vmem:[#allocation2 + $0xd0] sm:$0xff]
    %v59 = vld [vmem:[#allocation2 + $0xd8] sm:$0xff]
    %v60 = vld [vmem:[#allocation2 + $0xe0] sm:$0xff]
    %v61 = vld [vmem:[#allocation2 + $0xe8] sm:$0xff]
    %v62 = vld [vmem:[#allocation2 + $0xf0] sm:$0xff]
    %v63 = vld [vmem:[#allocation2 + $0xf8] sm:$0xff]
    %v64 = vld [vmem:[%s2] sm:$0x1]
    %v66 = vlaneseq
    %v67 = vshrl.u32 %v66, 7
    %v68 = vsub.s32 0, %v67
    %v69 = vrot.slane %v64, %v68
    %v75 = vcombine.low %v28, %v29
    %v76 = vcombine.low %v30, %v31
    %v78 = vunpack.c.l.s4 1983009808
    %v79 = vunpack.c.0.s8 %v78
    %v80 = vlaneseq
    %v81 = vshrl.u32 %v80, 7
    %v82 = vsub.s32 %v79, %v81
    %v83 = vrot.slane %v75, %v82
    %v85 = vunpack.c.l.s4 1983009808
    %v86 = vunpack.c.0.s8 %v85
    %v87 = vlaneseq
    %v88 = vshrl.u32 %v87, 7
    %v89 = vsub.s32 %v86, %v88
    %v90 = vrot.slane %v76, %v89
    %v91 = vcombine.low %v83, %v90
    %v92 = vcombine.high %v83, %v90
    %95 = vmatprep.subr.mxu0 0.0
    %96 = vmatpush1.msra.mxu0 %v47
    %97 = vmatprep.subr.mxu0 0.0
    %98 = vmatpush1.msra.mxu0 %v46
    %99 = vmatprep.subr.mxu0 0.0
    %100 = vmatpush1.msra.mxu0 %v45
    %101 = vmatprep.subr.mxu0 0.0
    %102 = vmatpush1.msra.mxu0 %v44
    %103 = vmatprep.subr.mxu0 0.0
    %104 = vmatpush1.msra.mxu0 %v43
    %105 = vmatprep.subr.mxu0 0.0
    %106 = vmatpush1.msra.mxu0 %v42
    %107 = vmatprep.subr.mxu0 0.0
    %108 = vmatpush1.msra.mxu0 %v41
    %109 = vmatprep.subr.mxu0 0.0
    %110 = vmatpush1.msra.mxu0 %v40
    %111 = vmatprep.subr.mxu0 0.0
    %112 = vmatpush1.msra.mxu0 %v39
    %113 = vmatprep.subr.mxu0 0.0
    %114 = vmatpush1.msra.mxu0 %v38
    %115 = vmatprep.subr.mxu0 0.0
    %116 = vmatpush1.msra.mxu0 %v37
    %117 = vmatprep.subr.mxu0 0.0
    %118 = vmatpush1.msra.mxu0 %v36
    %119 = vmatprep.subr.mxu0 0.0
    %120 = vmatpush1.msra.mxu0 %v35
    %121 = vmatprep.subr.mxu0 0.0
    %122 = vmatpush1.msra.mxu0 %v34
    %123 = vmatprep.subr.mxu0 0.0
    %124 = vmatpush1.msra.mxu0 %v33
    %125 = vmatprep.subr.mxu0 0.0
    %126 = vmatpush1.msra.mxu0 %v32
    %127 = vmatprep.subr.mxu0 0.0
    %128 = vmatpush2.msra.mxu0 %v63
    %129 = vmatprep.subr.mxu0 0.0
    %130 = vmatpush2.msra.mxu0 %v62
    %131 = vmatprep.subr.mxu0 0.0
    %132 = vmatpush2.msra.mxu0 %v61
    %133 = vmatprep.subr.mxu0 0.0
    %134 = vmatpush2.msra.mxu0 %v60
    %135 = vmatprep.subr.mxu0 0.0
    %136 = vmatpush2.msra.mxu0 %v59
    %137 = vmatprep.subr.mxu0 0.0
    %138 = vmatpush2.msra.mxu0 %v58
    %139 = vmatprep.subr.mxu0 0.0
    %140 = vmatpush2.msra.mxu0 %v57
    %141 = vmatprep.subr.mxu0 0.0
    %142 = vmatpush2.msra.mxu0 %v56
    %143 = vmatprep.subr.mxu0 0.0
    %144 = vmatpush2.msra.mxu0 %v55
    %145 = vmatprep.subr.mxu0 0.0
    %146 = vmatpush2.msra.mxu0 %v54
    %147 = vmatprep.subr.mxu0 0.0
    %148 = vmatpush2.msra.mxu0 %v53
    %149 = vmatprep.subr.mxu0 0.0
    %150 = vmatpush2.msra.mxu0 %v52
    %151 = vmatprep.subr.mxu0 0.0
    %152 = vmatpush2.msra.mxu0 %v51
    %153 = vmatprep.subr.mxu0 0.0
    %154 = vmatpush2.msra.mxu0 %v50
    %155 = vmatprep.subr.mxu0 0.0
    %156 = vmatpush2.msra.mxu0 %v49
    %157 = vmatprep.subr.mxu0 0.0
    %158 = vmatpush2.msra.mxu0 %v48
    %159 = vmatprep.mubr.f32.mxu0 %v92
    %160 = vmatmul.mubr.f32.gmra.mxu0 %v91
    %v161 = vpop.f32.mrf.mxu0
    %v162 = vadd.f32 %v69, %v161
    %v163 = vpop.f32.mrf.mxu0
    %164 = vdwg.mxu0
    %vm165 = vcmask 261120
    %166 = vst.msk [vmem:[#allocation4] sm:$0xff] %vm165, %v162
    // Predicated region
    $region18: #{forward.1} parent=1 // pred_check
      _
    $region19: #{forward.1} parent=1 // pred_check_branch
      %168 = sbr.rel (0) target = $region21
    $region20: #{forward.1} parent=1 // pred_region
      // Predicated region
      $region22: #{forward.1} parent=20 // pred_check
        _
      $region23: #{forward.1} parent=20 // pred_check_branch
        %170 = sbr.rel (0) target = $region25
      $region24: #{forward.1} parent=20 // pred_region
        // Predicated region
        $region26: #{forward.1} parent=24 // pred_check
          _
        $region27: #{forward.1} parent=24 // pred_check_branch
          %172 = sbr.rel target = $region29
        $region28: #{forward.1} parent=24 // pred_region
          // Predicated region
          $region41: #{forward.1} parent=28 // pred_check
            _
          $region42: #{forward.1} parent=28 // pred_check_branch
            %188 = sbr.rel (0) target = $region44
          $region43: #{forward.1} parent=28 // pred_region
            %s190 = ssub.s32 4, 1
            loop: start=0, step=1, limit=1
            $region45: #{forward.1} parent=43 // loop_pre_header
              _
            $region46: #{forward.1} parent=43 // loop_header
              %s192 = sphi 0, %s196
              %p193 = scmp.ge.s32.totalorder %s192, 1
              %s197 = sphi [#allocation4], [#allocation4]
              %s198 = sphi %s3, %s3
            $region47: #{forward.1} parent=43 // loop_header_branch
              %195 = sbr.rel (%p193) target = $region51
            $region48: #{forward.1} parent=43 // loop_body
              %v199 = vld [vmem:[%s197] sm:%s190]
              %200 = vst [vmem:[%s198] sm:%s190] %v199
            $region49: #{forward.1} parent=43 // loop_footer
              %s196 = sadd.s32 1, %s192
            $region50: #{forward.1} parent=43 // loop_footer_branch
              %191 = sbr.rel target = $region46
            $region51: #{forward.1} parent=43 // loop_exit
              _
          $region44: #{forward.1} parent=28 // pred_fallthru
            _
        $region29: #{forward.1} parent=24 // pred_fallthru
          _
        // Predicated region
        $region30: #{forward.1} parent=24 // pred_check
          _
        $region31: #{forward.1} parent=24 // pred_check_branch
          %174 = sbr.rel (0) target = $region33
        $region32: #{forward.1} parent=24 // pred_region
          %s176 = ssub.s32 4, 1
          loop: start=0, step=1, limit=1
          $region34: #{forward.1} parent=32 // loop_pre_header
            _
          $region35: #{forward.1} parent=32 // loop_header
            %s178 = sphi 0, %s182
            %p179 = scmp.ge.s32.totalorder %s178, 1
            %s183 = sphi [#allocation4], [#allocation4]
            %s184 = sphi %s3, %s3
          $region36: #{forward.1} parent=32 // loop_header_branch
            %181 = sbr.rel (%p179) target = $region40
          $region37: #{forward.1} parent=32 // loop_body
            %v185 = vld [vmem:[%s183] sm:%s176]
            %186 = vst [vmem:[%s184] sm:%s176] %v185
          $region38: #{forward.1} parent=32 // loop_footer
            %s182 = sadd.s32 1, %s178
          $region39: #{forward.1} parent=32 // loop_footer_branch
            %177 = sbr.rel target = $region35
          $region40: #{forward.1} parent=32 // loop_exit
            _
        $region33: #{forward.1} parent=24 // pred_fallthru
          _
      $region25: #{forward.1} parent=20 // pred_fallthru
        _
      %201 = vnop
    $region21: #{forward.1} parent=1 // pred_fallthru
      _
    // Predicated region
    $region52: #{forward.1} parent=1 // pred_check
      _
    $region53: #{forward.1} parent=1 // pred_check_branch
      %203 = sbr.rel (0) target = $region55
    $region54: #{forward.1} parent=1 // pred_region
      _
    $region55: #{forward.1} parent=1 // pred_fallthru
      _
    %204 = vsyncpa [#allocation3], 1

</llo_original>
